<compile_context>
chip_gen: v5e
topology: v5e:2x2
jax: 0.10.0
libtpu: 0.0.40
codegen_flags: <defaults>
</compile_context>

<pallas_src>
import jax
import jax.numpy as jnp
from jax.experimental import pallas as pl
from jax.experimental.pallas import tpu as pltpu


def _round_up(x, m):
    return ((x + m - 1) // m) * m


def _hamiltonian_kernel(kb_ref, jb_ref, s_row_ref, s_col_ref, j_ref, f_ref,
                        out_ref, acc_ref):
    # kb_ref/jb_ref : SMEM (num_pairs,) int32 -- lower-tri block ids (k >= j)
    # s_row_ref     : (TB, T) bf16  states columns of row-tile k
    # s_col_ref     : (TB, T) bf16  states columns of col-tile j
    # j_ref         : (T, T)  bf16  J[k-tile, j-tile]
    # f_ref         : (1, T)  f32   fields for col-tile j
    # out_ref       : (TB, 1) f32
    # acc_ref       : (TB, T) f32   elementwise accumulator (lane-reduced once)
    p = pl.program_id(1)

    @pl.when(p == 0)
    def _():
        acc_ref[...] = jnp.zeros_like(acc_ref)

    is_diag = kb_ref[p] == jb_ref[p]

    s_k = s_row_ref[...]
    s_j = s_col_ref[...]
    Jkj = j_ref[...]

    # Js[b, l] = sum_i s[b, i in tile k] * J[i, l in tile j]   (MXU, f32 acc)
    Js = jnp.dot(s_k, Jkj, preferred_element_type=jnp.float32)      # (TB, T)

    # Off-diagonal blocks (k > j) stand in for their transposes too -> x2.
    # The field term is added exactly once per spin column, via the unique
    # diagonal block that owns that column tile.
    scale = jnp.where(is_diag, 1.0, 2.0).astype(jnp.float32)
    f = jnp.where(is_diag, f_ref[...], 0.0)                          # (1, T)
    acc_ref[...] += s_j.astype(jnp.float32) * (scale * Js + f)

    @pl.when(p == pl.num_programs(1) - 1)
    def _():
        out_ref[...] = -jnp.sum(acc_ref[...], axis=-1, keepdims=True)


def spin_glass_hamiltonian(states, coupling_matrix, fields,
                           *, block_b=256, block_t=512):
    """states: (B, N) +/-1 spins; coupling_matrix: (N, N) symmetric, zero diag;
    fields: (N,). Returns Hamiltonian of shape (B,) in float32."""
    B, N = states.shape

    # Tile sizes: bf16 tiles need (16, 128) alignment; shrink for small inputs.
    TB = min(block_b, _round_up(B, 16))
    T = min(block_t, _round_up(N, 128))
    B_pad = _round_up(B, TB)
    N_pad = _round_up(N, T)

    # Zero padding is exact: padded spins/couplings/fields contribute nothing.
    s_bf16 = jnp.zeros((B_pad, N_pad), jnp.bfloat16)
    s_bf16 = s_bf16.at[:B, :N].set(states.astype(jnp.bfloat16))
    j_bf16 = jnp.zeros((N_pad, N_pad), jnp.bfloat16)
    j_bf16 = j_bf16.at[:N, :N].set(coupling_matrix.astype(jnp.bfloat16))
    f_f32 = jnp.zeros((1, N_pad), jnp.float32)
    f_f32 = f_f32.at[0, :N].set(fields.astype(jnp.float32))

    nbt = B_pad // TB
    nt = N_pad // T

    # Lower-triangular block sweep (k >= j): each J tile is read exactly once
    # per batch tile.
    kb_ids, jb_ids = [], []
    for k in range(nt):
        for j in range(k + 1):
            kb_ids.append(k)
            jb_ids.append(j)
    kb_ids = jnp.asarray(kb_ids, jnp.int32)
    jb_ids = jnp.asarray(jb_ids, jnp.int32)
    num_pairs = nt * (nt + 1) // 2

    grid_spec = pltpu.PrefetchScalarGridSpec(
        num_scalar_prefetch=2,
        grid=(nbt, num_pairs),
        in_specs=[
            pl.BlockSpec((TB, T), lambda b, p, kb, jb: (b, kb[p])),   # states (row tile)
            pl.BlockSpec((TB, T), lambda b, p, kb, jb: (b, jb[p])),   # states (col tile)
            pl.BlockSpec((T, T), lambda b, p, kb, jb: (kb[p], jb[p])),  # J tile
            pl.BlockSpec((1, T), lambda b, p, kb, jb: (0, jb[p])),    # fields tile
        ],
        out_specs=pl.BlockSpec((TB, 1), lambda b, p, kb, jb: (b, 0)),
        scratch_shapes=[pltpu.VMEM((TB, T), jnp.float32)],
    )

    out = pl.pallas_call(
        _hamiltonian_kernel,
        out_shape=jax.ShapeDtypeStruct((B_pad, 1), jnp.float32),
        grid_spec=grid_spec,
        compiler_params=pltpu.CompilerParams(
            # batch tiles independent -> shard across TCs on v7x; block-pair
            # axis is the accumulator reduction.
            dimension_semantics=("parallel", "arbitrary"),
            # Actual usage at default tiles is ~5 MiB; 48 MiB cap leaves >20%
            # headroom even on v7x's 64 MiB physical VMEM.
            vmem_limit_bytes=48 * 1024 * 1024,
        ),
    )(kb_ids, jb_ids, s_bf16, s_bf16, j_bf16, f_f32)

    return out[:B, 0]


def build_coupling_matrix(couplings, number_of_spins):
    """Gather-based (scatter-free) equivalent of obtain_couplings_as_matrix:
    lower-triangular couplings vector (torch.tril_indices(-1) row-major order)
    -> full symmetric matrix with zero diagonal. Plain-JAX glue."""
    n = number_of_spins
    i = jax.lax.broadcasted_iota(jnp.int32, (n, n), 0)
    j = jax.lax.broadcasted_iota(jnp.int32, (n, n), 1)
    lower = i > j
    flat_idx = jnp.where(lower, (i * (i - 1)) // 2 + j, 0)
    vals = jnp.where(lower, couplings.astype(jnp.float32)[flat_idx], 0.0)
    return vals + vals.T


if __name__ == "__main__":
    key = jax.random.PRNGKey(0)
    k_couplings, k_fields, k_states = jax.random.split(key, 3)

    # Module config: number_of_spins = N; couplings has N*(N-1)/2 entries.
    number_of_spins = 16
    batch = 8
    number_of_couplings = number_of_spins * (number_of_spins - 1) // 2

    # Deterministic parameter init (mirrors sample_random_model:
    # couplings ~ N(0, sigma), fields ~ N(0, 1/sigma) with sigma = 1/N).
    sigma = 1.0 / float(number_of_spins)
    couplings = sigma * jax.random.normal(k_couplings, (number_of_couplings,), jnp.float32)
    fields = (1.0 / sigma) * jax.random.normal(k_fields, (number_of_spins,), jnp.float32)

    # +/-1 spin states (bernoulli_spins-style input).
    bern = jax.random.bernoulli(k_states, 0.5, (batch, number_of_spins))
    states = jnp.where(bern, 1.0, -1.0).astype(jnp.float32)

    coupling_matrix = build_coupling_matrix(couplings, number_of_spins)

    hamiltonian = spin_glass_hamiltonian(states, coupling_matrix, fields)
    hamiltonian = jax.block_until_ready(hamiltonian)
    assert hamiltonian.shape == (batch,)

    # Reference at the kernel's streaming precision (J in bf16, f32 accumulate).
    hi = jax.lax.Precision.HIGHEST
    J_bf = coupling_matrix.astype(jnp.bfloat16).astype(jnp.float32)
    ref_bf16 = (-jnp.einsum("bi,ij,bj->b", states, J_bf, states, precision=hi)
                - jnp.einsum("i,bi->b", fields, states, precision=hi))
    # Full f32 reference (module semantics) with tolerance for bf16 J entries.
    ref_f32 = (-jnp.einsum("bi,ij,bj->b", states, coupling_matrix, states, precision=hi)
               - jnp.einsum("i,bi->b", fields, states, precision=hi))

    assert jnp.allclose(hamiltonian, ref_bf16, atol=1e-2, rtol=1e-3), (
        hamiltonian, ref_bf16)
    assert jnp.allclose(hamiltonian, ref_f32, atol=2e-1, rtol=2e-2), (
        hamiltonian, ref_f32)

    print("KERNEL_OK")
</pallas_src>

<mosaic_0001>
module attributes {stable_mosaic.version = 11 : i64} {
  func.func @_hamiltonian_kernel(%arg0: i32, %arg1: i32, %arg2: memref<1xi32, #tpu.memory_space<smem>>, %arg3: memref<1xi32, #tpu.memory_space<smem>>, %arg4: memref<16x128xbf16, #tpu.memory_space<vmem>>, %arg5: memref<16x128xbf16, #tpu.memory_space<vmem>>, %arg6: memref<128x128xbf16, #tpu.memory_space<vmem>>, %arg7: memref<1x128xf32, #tpu.memory_space<vmem>>, %arg8: memref<16x1xf32, #tpu.memory_space<vmem>>, %arg9: memref<16x128xf32, #tpu.memory_space<vmem>>) attributes {dimension_semantics = [#tpu.dimension_semantics<parallel>, #tpu.dimension_semantics<arbitrary>], iteration_bounds = array<i64: 1, 1>, scalar_prefetch = 2 : i64, scratch_operands = 1 : i64, tpu.core_type = #tpu.core_type<tc>, window_params = [{transform_indices = @transform_0, window_bounds = array<i64: 16, 128>}, {transform_indices = @transform_1, window_bounds = array<i64: 16, 128>}, {transform_indices = @transform_2, window_bounds = array<i64: 128, 128>}, {transform_indices = @transform_3, window_bounds = array<i64: 1, 128>}, {transform_indices = @transform_4, window_bounds = array<i64: 16, 1>}]} {
    %c0_i32 = arith.constant 0 : i32
    %0 = arith.cmpi eq, %arg1, %c0_i32 : i32
    %1 = arith.extui %0 : i1 to i32
    %c0_i32_0 = arith.constant 0 : i32
    %2 = arith.cmpi ne, %1, %c0_i32_0 : i32
    scf.if %2 {
      %cst_17 = arith.constant 0.000000e+00 : f32
      %28 = vector.broadcast %cst_17 : f32 to vector<16x128xf32>
      %c0_18 = arith.constant 0 : index
      %c0_19 = arith.constant 0 : index
      %29 = vector.load %arg9[%c0_18, %c0_19] : memref<16x128xf32, #tpu.memory_space<vmem>>, vector<16x128xf32>
      tpu.vector_store %arg9[%c0_18, %c0_19], %28 {strides = array<i32>} : memref<16x128xf32, #tpu.memory_space<vmem>>, vector<16x128xf32>,
    } else {
    }
    %3 = arith.index_cast %arg1 : i32 to index
    %4 = memref.load %arg2[%3] : memref<1xi32, #tpu.memory_space<smem>>
    %5 = arith.index_cast %arg1 : i32 to index
    %6 = memref.load %arg3[%5] : memref<1xi32, #tpu.memory_space<smem>>
    %7 = arith.cmpi eq, %4, %6 : i32
    %c0 = arith.constant 0 : index
    %c0_1 = arith.constant 0 : index
    %8 = vector.load %arg4[%c0, %c0_1] : memref<16x128xbf16, #tpu.memory_space<vmem>>, vector<16x128xbf16>
    %c0_2 = arith.constant 0 : index
    %c0_3 = arith.constant 0 : index
    %9 = vector.load %arg5[%c0_2, %c0_3] : memref<16x128xbf16, #tpu.memory_space<vmem>>, vector<16x128xbf16>
    %c0_4 = arith.constant 0 : index
    %c0_5 = arith.constant 0 : index
    %10 = vector.load %arg6[%c0_4, %c0_5] : memref<128x128xbf16, #tpu.memory_space<vmem>>, vector<128x128xbf16>
    %cst = arith.constant dense<0.000000e+00> : vector<16x128xf32>
    %11 = tpu.matmul %8, %10, %cst {dimension_numbers = #tpu.dot_dimension_numbers<[1], [0], [0], [1], [0, 0, 1, 1], [], []>} : vector<16x128xbf16>, vector<128x128xbf16>, vector<16x128xf32> -> vector<16x128xf32>
    %cst_6 = arith.constant 1.000000e+00 : f32
    %cst_7 = arith.constant 2.000000e+00 : f32
    %12 = arith.select %7, %cst_6, %cst_7 : f32
    %c0_8 = arith.constant 0 : index
    %c0_9 = arith.constant 0 : index
    %13 = vector.load %arg7[%c0_8, %c0_9] : memref<1x128xf32, #tpu.memory_space<vmem>>, vector<1x128xf32>
    %cst_10 = arith.constant 0.000000e+00 : f32
    %14 = vector.broadcast %cst_10 : f32 to vector<1x128xf32>
    %15 = arith.select %7, %13, %14 : vector<1x128xf32>
    %c0_11 = arith.constant 0 : index
    %c0_12 = arith.constant 0 : index
    %16 = vector.load %arg9[%c0_11, %c0_12] : memref<16x128xf32, #tpu.memory_space<vmem>>, vector<16x128xf32>
    %17 = arith.extf %9 : vector<16x128xbf16> to vector<16x128xf32>
    %18 = vector.broadcast %12 : f32 to vector<16x128xf32>
    %19 = arith.mulf %18, %11 : vector<16x128xf32>
    %20 = vector.broadcast %15 : vector<1x128xf32> to vector<16x128xf32>
    %21 = arith.addf %19, %20 : vector<16x128xf32>
    %22 = arith.mulf %17, %21 : vector<16x128xf32>
    %23 = arith.addf %16, %22 : vector<16x128xf32>
    %c0_13 = arith.constant 0 : index
    %c0_14 = arith.constant 0 : index
    %24 = vector.load %arg9[%c0_13, %c0_14] : memref<16x128xf32, #tpu.memory_space<vmem>>, vector<16x128xf32>
    tpu.vector_store %arg9[%c0_13, %c0_14], %23 {strides = array<i32>} : memref<16x128xf32, #tpu.memory_space<vmem>>, vector<16x128xf32>,
    %c0_i32_15 = arith.constant 0 : i32
    %25 = arith.cmpi eq, %arg1, %c0_i32_15 : i32
    %26 = arith.extui %25 : i1 to i32
    %c0_i32_16 = arith.constant 0 : i32
    %27 = arith.cmpi ne, %26, %c0_i32_16 : i32
    scf.if %27 {
      %c0_17 = arith.constant 0 : index
      %c0_18 = arith.constant 0 : index
      %28 = vector.load %arg9[%c0_17, %c0_18] : memref<16x128xf32, #tpu.memory_space<vmem>>, vector<16x128xf32>
      %cst_19 = arith.constant dense<0.000000e+00> : vector<16xf32>
      %29 = vector.multi_reduction <add>, %28, %cst_19 [1] : vector<16x128xf32> to vector<16xf32>
      %30 = vector.shape_cast %29 : vector<16xf32> to vector<16x1xf32>
      %cst_20 = arith.constant 0.000000e+00 : f32
      %31 = vector.broadcast %cst_20 : f32 to vector<16x1xf32>
      %32 = arith.subf %31, %30 : vector<16x1xf32>
      %c0_21 = arith.constant 0 : index
      %c0_22 = arith.constant 0 : index
      %33 = vector.load %arg8[%c0_21, %c0_22] : memref<16x1xf32, #tpu.memory_space<vmem>>, vector<16x1xf32>
      tpu.vector_store %arg8[%c0_21, %c0_22], %32 {strides = array<i32>} : memref<16x1xf32, #tpu.memory_space<vmem>>, vector<16x1xf32>,
    } else {
    }
    return
  }
  func.func @transform_0(%arg0: i32, %arg1: i32, %arg2: memref<1xi32, #tpu.memory_space<smem>>, %arg3: memref<1xi32, #tpu.memory_space<smem>>) -> (i32, i32) {
    %0 = arith.index_cast %arg1 : i32 to index
    %1 = memref.load %arg2[%0] : memref<1xi32, #tpu.memory_space<smem>>
    %c0_i32 = arith.constant 0 : i32
    return %arg0, %1 : i32, i32
  }
  func.func @transform_1(%arg0: i32, %arg1: i32, %arg2: memref<1xi32, #tpu.memory_space<smem>>, %arg3: memref<1xi32, #tpu.memory_space<smem>>) -> (i32, i32) {
    %0 = arith.index_cast %arg1 : i32 to index
    %1 = memref.load %arg3[%0] : memref<1xi32, #tpu.memory_space<smem>>
    %c0_i32 = arith.constant 0 : i32
    return %arg0, %1 : i32, i32
  }
  func.func @transform_2(%arg0: i32, %arg1: i32, %arg2: memref<1xi32, #tpu.memory_space<smem>>, %arg3: memref<1xi32, #tpu.memory_space<smem>>) -> (i32, i32) {
    %0 = arith.index_cast %arg1 : i32 to index
    %1 = memref.load %arg2[%0] : memref<1xi32, #tpu.memory_space<smem>>
    %2 = arith.index_cast %arg1 : i32 to index
    %3 = memref.load %arg3[%2] : memref<1xi32, #tpu.memory_space<smem>>
    %c0_i32 = arith.constant 0 : i32
    return %1, %3 : i32, i32
  }
  func.func @transform_3(%arg0: i32, %arg1: i32, %arg2: memref<1xi32, #tpu.memory_space<smem>>, %arg3: memref<1xi32, #tpu.memory_space<smem>>) -> (i32, i32) {
    %0 = arith.index_cast %arg1 : i32 to index
    %1 = memref.load %arg3[%0] : memref<1xi32, #tpu.memory_space<smem>>
    %c0_i32 = arith.constant 0 : i32
    %c0_i32_0 = arith.constant 0 : i32
    return %c0_i32, %1 : i32, i32
  }
  func.func @transform_4(%arg0: i32, %arg1: i32, %arg2: memref<1xi32, #tpu.memory_space<smem>>, %arg3: memref<1xi32, #tpu.memory_space<smem>>) -> (i32, i32) {
    %c0_i32 = arith.constant 0 : i32
    %c0_i32_0 = arith.constant 0 : i32
    return %arg0, %c0_i32 : i32, i32
  }
}

</mosaic_0001>

<llo_original>
// kernel: tpu_custom_call.1
$region0: #{tpu_custom_call.1}
  #allocation0 [shape = 'u32[]', space=smem, size = 0x4, offset = 0x4, fixed_abs, tag = 'smem constant byte address 0x4 - core index']
  #allocation1 [shape = 'u32[72,128]{1,0:T(1,128)}', space=vmem, size = 0x9000, scoped, tag = 'internal scratch']
  #allocation2 [shape = 'f32[16,128]{1,0:T(8,128)}', space=vmem, size = 0x2000, scoped, tag = 'scratch operand']
  #allocation3 [shape = 's32[1]{0}', space=sflag, size = 0x4, scoped, tag = 'scoped memory for tpu_custom_call.1']
  #allocation4 [shape = 's32[1]{0:T(128)S(6)}', space=smem, size = 0x200, scoped, tag = 'prefetched SMEM operand 0']
  #allocation5 [shape = 's32[1]{0:T(128)S(6)}', space=smem, size = 0x200, scoped, tag = 'prefetched SMEM operand 1']
  %s0 = inlined_call_operand.<no memory space> [shape: s32[1], index: 0, kind: input, shape index: {}]
  %s1 = inlined_call_operand.<no memory space> [shape: s32[1], index: 1, kind: input, shape index: {}]
  %s2 = inlined_call_operand.hbm [shape: bf16[16,128], index: 2, kind: input, shape index: {}]
  %s3 = inlined_call_operand.hbm [shape: bf16[16,128], index: 3, kind: input, shape index: {}]
  %s4 = inlined_call_operand.hbm [shape: bf16[128,128], index: 4, kind: input, shape index: {}]
  %s5 = inlined_call_operand.vmem [shape: f32[1,128], index: 5, kind: input, shape index: {}]
  %s6 = inlined_call_operand.vmem [shape: f32[16,1], index: 6, kind: output, shape index: {}]
  %s7 = sld [smem:[#allocation0]]
  $region46: #{tpu_custom_call.1} parent=0
    _
  %s9 = ssub.s32 1, %s7
  %s10 = scalar_select 0, %s9, %s7
  %11 = sst [smem:[#allocation4]] %s0
  %12 = sst [smem:[#allocation5]] %s1
  $region1: #{tpu_custom_call.1} parent=0
    #allocation6 [shape = 'u8[4096]{0}', space=vmem, size = 0x1000, scoped, tag = 'input window, operand 2, single buffered']
    #allocation7 [shape = 's32[1]{0}', space=sflag, size = 0x4, scoped, tag = 'scoped memory for tpu_custom_call.1']
    #allocation8 [shape = 'u8[4096]{0}', space=vmem, size = 0x1000, scoped, tag = 'input window, operand 3, single buffered']
    #allocation9 [shape = 's32[1]{0}', space=sflag, size = 0x4, scoped, tag = 'scoped memory for tpu_custom_call.1']
    #allocation10 [shape = 'u8[32768]{0}', space=vmem, size = 0x8000, scoped, tag = 'input window, operand 4, single buffered']
    %13 = vsyncpa [#allocation7], 0
    %14 = vsyncpa [#allocation9], 0
    // Predicated region
    $region2: #{tpu_custom_call.1} parent=1 // pred_check
      _
    $region3: #{tpu_custom_call.1} parent=1 // pred_check_branch
      %16 = sbr.rel (0) target = $region5
    $region4: #{tpu_custom_call.1} parent=1 // pred_region
      %s17 = sld [smem:[#allocation4]]
      %19 = vsyncadd [#allocation7], 0
      %s20 = smul.addr %s17, 4
      %s21 = scalar_lea.hbm %s2, %s20
      %s22 = sshll.u32 %s21, 4
      %s23 = int_to_ptr.hbm [resolvable:$true] %s22
      %s24 = sshll.u32 [#allocation6], 4
      %s25 = int_to_ptr.vmem [resolvable:$true] %s24
      %30 = dma.hbm_to_vmem [thread:$0]  %s23, 128, %s25, [#allocation7], 64, 64, 4
    $region5: #{tpu_custom_call.1} parent=1 // pred_fallthru
      _
    // Predicated region
    $region6: #{tpu_custom_call.1} parent=1 // pred_check
      _
    $region7: #{tpu_custom_call.1} parent=1 // pred_check_branch
      %32 = sbr.rel (0) target = $region9
    $region8: #{tpu_custom_call.1} parent=1 // pred_region
      %s33 = sld [smem:[#allocation5]]
      %35 = vsyncadd [#allocation9], 0
      %s36 = smul.addr %s33, 4
      %s37 = scalar_lea.hbm %s3, %s36
      %s38 = sshll.u32 %s37, 4
      %s39 = int_to_ptr.hbm [resolvable:$true] %s38
      %s40 = sshll.u32 [#allocation8], 4
      %s41 = int_to_ptr.vmem [resolvable:$true] %s40
      %46 = dma.hbm_to_vmem [thread:$0]  %s39, 128, %s41, [#allocation9], 64, 64, 4
    $region9: #{tpu_custom_call.1} parent=1 // pred_fallthru
      _
    // Predicated region
    $region10: #{tpu_custom_call.1} parent=1 // pred_check
      _
    $region11: #{tpu_custom_call.1} parent=1 // pred_check_branch
      %48 = sbr.rel (0) target = $region13
    $region12: #{tpu_custom_call.1} parent=1 // pred_region
      %s49 = sld [smem:[#allocation4]]
      %s50 = sld [smem:[#allocation5]]
      %s51 = smul.u32 16, %s49
      %53 = vsyncadd [#allocation9], 0
      %s54 = sadd.s32 %s50, %s51
      %s55 = smul.addr %s54, 4
      %s56 = scalar_lea.hbm %s4, %s55
      %s57 = sshll.u32 %s56, 4
      %s58 = int_to_ptr.hbm [resolvable:$true] %s57
      %s59 = sshll.u32 [#allocation10], 4
      %s60 = int_to_ptr.vmem [resolvable:$true] %s59
      %65 = dma.hbm_to_vmem [thread:$0]  %s58, 1024, %s60, [#allocation9], 64, 64, 4
    $region13: #{tpu_custom_call.1} parent=1 // pred_fallthru
      _
    // Predicated region
    $region14: #{tpu_custom_call.1} parent=1 // pred_check
      _
    $region15: #{tpu_custom_call.1} parent=1 // pred_check_branch
      %67 = sbr.rel (0) target = $region17
    $region16: #{tpu_custom_call.1} parent=1 // pred_region
      %s68 = sld [smem:[#allocation5]]
      %p69 = scmp.lt.s32.totalorder %s68, 0
      %s70 = scalar_select %p69, %s68, 0
      %s71 = scalar_lea.vmem %s5, %s70
      %s72 = sld [smem:[#allocation5]]
    $region17: #{tpu_custom_call.1} parent=1 // pred_fallthru
      _
    // Predicated region
    $region18: #{tpu_custom_call.1} parent=1 // pred_check
      _
    $region19: #{tpu_custom_call.1} parent=1 // pred_check_branch
      %74 = sbr.rel (0) target = $region21
    $region20: #{tpu_custom_call.1} parent=1 // pred_region
      %76 = dma.done [#allocation7], 128
    $region21: #{tpu_custom_call.1} parent=1 // pred_fallthru
      _
    // Predicated region
    $region22: #{tpu_custom_call.1} parent=1 // pred_check
      _
    $region23: #{tpu_custom_call.1} parent=1 // pred_check_branch
      %78 = sbr.rel (0) target = $region25
    $region24: #{tpu_custom_call.1} parent=1 // pred_region
      %80 = dma.done [#allocation9], 128
    $region25: #{tpu_custom_call.1} parent=1 // pred_fallthru
      _
    // Predicated region
    $region26: #{tpu_custom_call.1} parent=1 // pred_check
      _
    $region27: #{tpu_custom_call.1} parent=1 // pred_check_branch
      %82 = sbr.rel (0) target = $region29
    $region28: #{tpu_custom_call.1} parent=1 // pred_region
      %84 = dma.done [#allocation9], 1024
    $region29: #{tpu_custom_call.1} parent=1 // pred_fallthru
      _
    %s85 = sld [smem:[#allocation5]]
    %p86 = scmp.lt.s32.totalorder %s85, 0
    %s87 = scalar_select %p86, %s85, 0
    %s88 = scalar_lea.vmem %s5, %s87
    %s89 = sld [smem:[#allocation4]]
    %s90 = sld [smem:[#allocation5]]
    %s91 = sld [smem:[#allocation4]]
    %s92 = sld [smem:[#allocation5]]
    %s93 = smul.u32 16, %s91
    %s94 = sld [smem:[#allocation5]]
    %p95 = scmp.lt.s32.totalorder %s94, 0
    %s96 = scalar_select %p95, %s94, 0
    %s97 = scalar_lea.vmem %s5, %s96
    %s98 = sld [smem:[#allocation5]]
    %p99 = scmp.eq.s32.totalorder 0, 0
    // Predicated region
    $region30: #{tpu_custom_call.1} parent=1 // pred_check
      %p100 = pneg %p99
    $region31: #{tpu_custom_call.1} parent=1 // pred_check_branch
      %102 = sbr.rel (%p100) target = $region33
    $region32: #{tpu_custom_call.1} parent=1 // pred_region
      %103 = vst [vmem:[#allocation2] sm:$0xff] 0.0
      %104 = vst [vmem:[#allocation2 + $0x8] sm:$0xff] 0.0
    $region33: #{tpu_custom_call.1} parent=1 // pred_fallthru
      _
    %s105 = sld [smem:[#allocation4]]
    %s106 = sld [smem:[#allocation5]]
    %p107 = scmp.eq.s32.totalorder %s105, %s106
    %v108 = vld [vmem:[#allocation6] sm:$0xf]
    %v109 = vld [vmem:[#allocation6 + $0x4] sm:$0xf]
    %v110 = vld [vmem:[#allocation8] sm:$0xf]
    %v111 = vld [vmem:[#allocation8 + $0x4] sm:$0xf]
    %v112 = vld [vmem:[#allocation10] sm:$0xf]
    %v113 = vld [vmem:[#allocation10 + $0x4] sm:$0xf]
    %v114 = vld [vmem:[#allocation10 + $0x8] sm:$0xf]
    %v115 = vld [vmem:[#allocation10 + $0xc] sm:$0xf]
    %v116 = vld [vmem:[#allocation10 + $0x10] sm:$0xf]
    %v117 = vld [vmem:[#allocation10 + $0x14] sm:$0xf]
    %v118 = vld [vmem:[#allocation10 + $0x18] sm:$0xf]
    %v119 = vld [vmem:[#allocation10 + $0x1c] sm:$0xf]
    %v120 = vld [vmem:[#allocation10 + $0x20] sm:$0xf]
    %v121 = vld [vmem:[#allocation10 + $0x24] sm:$0xf]
    %v122 = vld [vmem:[#allocation10 + $0x28] sm:$0xf]
    %v123 = vld [vmem:[#allocation10 + $0x2c] sm:$0xf]
    %v124 = vld [vmem:[#allocation10 + $0x30] sm:$0xf]
    %v125 = vld [vmem:[#allocation10 + $0x34] sm:$0xf]
    %v126 = vld [vmem:[#allocation10 + $0x38] sm:$0xf]
    %v127 = vld [vmem:[#allocation10 + $0x3c] sm:$0xf]
    %v130 = vunpack.c.l.b16 %v108
    %v131 = vunpack.c.l.b16 %v109
    %v132 = vpack.c.b16 %v131, %v130
    %v150 = vunpack.c.l.b16 %v112
    %v151 = vunpack.c.l.b16 %v113
    %v152 = vunpack.c.l.b16 %v114
    %v153 = vunpack.c.l.b16 %v115
    %v154 = vunpack.c.l.b16 %v116
    %v155 = vunpack.c.l.b16 %v117
    %v156 = vunpack.c.l.b16 %v118
    %v157 = vunpack.c.l.b16 %v119
    %v158 = vunpack.c.l.b16 %v120
    %v159 = vunpack.c.l.b16 %v121
    %v160 = vunpack.c.l.b16 %v122
    %v161 = vunpack.c.l.b16 %v123
    %v162 = vunpack.c.l.b16 %v124
    %v163 = vunpack.c.l.b16 %v125
    %v164 = vunpack.c.l.b16 %v126
    %v165 = vunpack.c.l.b16 %v127
    %v166 = vpack.c.b16 %v151, %v150
    %v167 = vpack.c.b16 %v153, %v152
    %v168 = vpack.c.b16 %v155, %v154
    %v169 = vpack.c.b16 %v157, %v156
    %v170 = vpack.c.b16 %v159, %v158
    %v171 = vpack.c.b16 %v161, %v160
    %v172 = vpack.c.b16 %v163, %v162
    %v173 = vpack.c.b16 %v165, %v164
    %182 = vmatpush.bf16.msra.mxu0 %v173
    %183 = vmatpush.bf16.msra.mxu0 %v172
    %184 = vmatpush.bf16.msra.mxu0 %v171
    %185 = vmatpush.bf16.msra.mxu0 %v170
    %186 = vmatpush.bf16.msra.mxu0 %v169
    %187 = vmatpush.bf16.msra.mxu0 %v168
    %188 = vmatpush.bf16.msra.mxu0 %v167
    %189 = vmatpush.bf16.msra.mxu0 %v166
    %190 = vmatmul.bf16.gmra.mxu0 %v132
    %v191 = vpop.f32.mrf.mxu0
    %v192 = vadd.f32 0.0, %v191
    %v193 = vpop.f32.mrf.mxu0
    %v194 = vadd.f32 0.0, %v193
    %195 = vdwg.mxu0
    %s196 = scalar_select %p107, 1.0, 2.0
    %v197 = vld [vmem:[%s97] sm:$0x1]
    %s198 = scalar_select %p107, 1, 0
    %v199 = vstv %s198
    %vm200 = vcmp.eq.s32.totalorder %v199, 1
    %v201 = vsel %vm200, %v197, 0.0
    %v202 = vld [vmem:[#allocation2] sm:$0xff]
    %v203 = vld [vmem:[#allocation2 + $0x8] sm:$0xff]
    %v204 = vunpack.c.l.bf16 %v110
    %v205 = vunpack.c.l.bf16 %v111
    %v206 = vstv %s196
    %v207 = vmul.f32 %v206, %v192
    %v208 = vmul.f32 %v206, %v194
    %v210 = vperm.slane %v201, 0
    %v212 = vadd.f32 %v207, %v210
    %v213 = vadd.f32 %v208, %v210
    %v214 = vmul.f32 %v204, %v212
    %v215 = vmul.f32 %v205, %v213
    %v216 = vadd.f32 %v202, %v214
    %v217 = vadd.f32 %v203, %v215
    %218 = vst [vmem:[#allocation2] sm:$0xff] %v216
    %219 = vst [vmem:[#allocation2 + $0x8] sm:$0xff] %v217
    // Predicated region
    $region34: #{tpu_custom_call.1} parent=1 // pred_check
      %p220 = pneg %p99
    $region35: #{tpu_custom_call.1} parent=1 // pred_check_branch
      %222 = sbr.rel (%p220) target = $region37
    $region36: #{tpu_custom_call.1} parent=1 // pred_region
      %v223 = vld [vmem:[#allocation2] sm:$0xff]
      %v224 = vld [vmem:[#allocation2 + $0x8] sm:$0xff]
      %225 = vadd.xlane.f32.xlu0 %v223
      %v226 = vpop.xlane.xlu0 %225
      %227 = vadd.xlane.f32.xlu0 %v224
      %v228 = vpop.xlane.xlu0 %227
      %v229 = vsub.f32 0.0, %v226
      %v230 = vsub.f32 0.0, %v228
      %vm231 = vcmask 7168
      %232 = vst.msk [vmem:[%s6] sm:$0xff] %vm231, %v229
      %233 = vst.msk [vmem:[%s6 + $0x8] sm:$0xff] %vm231, %v230
    $region37: #{tpu_custom_call.1} parent=1 // pred_fallthru
      _
    // Predicated region
    $region38: #{tpu_custom_call.1} parent=1 // pred_check
      _
    $region39: #{tpu_custom_call.1} parent=1 // pred_check_branch
      %235 = sbr.rel (0) target = $region41
    $region40: #{tpu_custom_call.1} parent=1 // pred_region
      _
    $region41: #{tpu_custom_call.1} parent=1 // pred_fallthru
      _
    // Predicated region
    $region42: #{tpu_custom_call.1} parent=1 // pred_check
      _
    $region43: #{tpu_custom_call.1} parent=1 // pred_check_branch
      %237 = sbr.rel (0) target = $region45
    $region44: #{tpu_custom_call.1} parent=1 // pred_region
      _
    $region45: #{tpu_custom_call.1} parent=1 // pred_fallthru
      _
    %238 = vsyncpa [#allocation7], 1
    %239 = vsyncpa [#allocation9], 1

</llo_original>
